<compile_context>
chip_gen: v6e
topology: v6e:2x2x1
jax: 0.10.0
libtpu: 0.0.40
codegen_flags: <defaults>
</compile_context>

<pallas_src>
import functools
import math

import jax
import jax.numpy as jnp
from jax.experimental import pallas as pl
from jax.experimental.pallas import tpu as pltpu

BN_EPS = 1e-5


# ---------------------------------------------------------------------------
# Pass 1 (resident weights): h = x @ w1 (bf16 MXU, f32 accumulation), written
# once as bf16, plus per-batch-tile partial BN statistics in f32.
# ---------------------------------------------------------------------------
def _layer1_stats_resident_kernel(x_ref, w1_ref, h_ref, stats_ref):
    a = x_ref[...].astype(jnp.bfloat16)
    w = w1_ref[...].astype(jnp.bfloat16)
    h = jnp.dot(a, w, preferred_element_type=jnp.float32)      # (tm, H) f32
    h_ref[...] = h.astype(h_ref.dtype)                          # bf16 intermediate
    s = jnp.sum(h, axis=0, keepdims=True)                       # (1, H)
    sq = jnp.sum(h * h, axis=0, keepdims=True)                  # (1, H)
    # One (8, H) stats block per batch tile: sublane 0 = sum, sublanes 1..7 = sumsq.
    # Single unmasked full-block store; the host only reads sublanes 0 and 1.
    rows = jax.lax.broadcasted_iota(jnp.int32, stats_ref.shape[1:], 0)
    s8 = jnp.broadcast_to(s, stats_ref.shape[1:])
    q8 = jnp.broadcast_to(sq, stats_ref.shape[1:])
    stats_ref[...] = jnp.where(rows == 0, s8, q8)[None]


# ---------------------------------------------------------------------------
# Pass 1 fallback (K-tiled for very large in_dim): accumulate in an f32 VMEM
# scratch, write bf16 h and the partial stats once at the last K step.
# ---------------------------------------------------------------------------
def _layer1_stats_ktiled_kernel(x_ref, w1_ref, h_ref, stats_ref, acc_ref):
    k = pl.program_id(1)

    @pl.when(k == 0)
    def _():
        acc_ref[...] = jnp.zeros_like(acc_ref)

    a = x_ref[...].astype(jnp.bfloat16)
    w = w1_ref[...].astype(jnp.bfloat16)
    acc_ref[...] += jnp.dot(a, w, preferred_element_type=jnp.float32)

    @pl.when(k == pl.num_programs(1) - 1)
    def _():
        h = acc_ref[...]
        h_ref[...] = h.astype(h_ref.dtype)
        s = jnp.sum(h, axis=0, keepdims=True)
        sq = jnp.sum(h * h, axis=0, keepdims=True)
        rows = jax.lax.broadcasted_iota(jnp.int32, stats_ref.shape[1:], 0)
        s8 = jnp.broadcast_to(s, stats_ref.shape[1:])
        q8 = jnp.broadcast_to(sq, stats_ref.shape[1:])
        stats_ref[...] = jnp.where(rows == 0, s8, q8)[None]


# ---------------------------------------------------------------------------
# Pass 2: out = relu(h * scale + shift) @ w2 + b2 (same body for the resident
# and j-tiled spec variants; only BlockSpecs / grid differ).
# ---------------------------------------------------------------------------
def _bn_relu_layer2_kernel(h_ref, scale_ref, shift_ref, w2_ref, b2_ref, o_ref):
    hf = h_ref[...].astype(jnp.float32)
    y = jnp.maximum(hf * scale_ref[...] + shift_ref[...], 0.0)
    y = y.astype(jnp.bfloat16)
    w = w2_ref[...].astype(jnp.bfloat16)
    o_ref[...] = (jnp.dot(y, w, preferred_element_type=jnp.float32)
                  + b2_ref[...]).astype(o_ref.dtype)


def _pick_tile(dim, target, multiple):
    """Largest tile <= target that divides `dim` and is a multiple of `multiple`."""
    assert dim % multiple == 0, (dim, multiple)
    t = min(target, dim)
    t = max(multiple, (t // multiple) * multiple)
    while dim % t != 0:
        t -= multiple
    return t


def _pick_batch_tile(n, target):
    # Keep at least two batch tiles when possible so the "parallel" batch axis can be
    # sharded across v7x's two TensorCores; prefer 256-multiples for the v6e/v7x MXU.
    if n >= 16:
        target = min(target, n // 2)
    if n % 256 == 0 and target >= 256:
        return _pick_tile(n, target, 256)
    return _pick_tile(n, target, 8)


def _vmem_limit_bytes(blocks, scratch=()):
    """Tight per-call VMEM budget computed from the actual (double-buffered) blocks."""
    total = 0
    for shape, dtype in blocks:
        total += 2 * math.prod(shape) * jnp.dtype(dtype).itemsize  # double-buffered
    for shape, dtype in scratch:
        total += math.prod(shape) * jnp.dtype(dtype).itemsize
    limit = int(total * 1.5) + (2 << 20)          # headroom for in-kernel bf16 casts
    limit = -(-limit // (1 << 20)) * (1 << 20)    # round up to 1 MiB
    return min(limit, 56 << 20)                   # stay well under v7x's 64 MiB/TC


def prediction_mlp(x, w1, b1, gamma, beta, w2, b2, *,
                   tm=512, tk=512, tn=512, max_resident_weight_bytes=8 << 20):
    """SimSiam prediction_MLP forward, PyTorch train-mode BatchNorm semantics.

    x: [N, in_dim] f32 -> [N, out_dim] f32.
    b1 is accepted for interface parity but never read: a Linear bias immediately
    followed by train-mode BatchNorm cancels exactly in the mean subtraction.
    """
    del b1
    n, in_dim = x.shape
    hidden = w1.shape[1]
    out_dim = w2.shape[1]
    assert n % 8 == 0, "batch must be a multiple of 8 (sublane)"
    assert hidden % 128 == 0, "hidden_dim must be lane-dense (multiple of 128)"
    assert out_dim % 128 == 0, "out_dim must be lane-dense (multiple of 128)"

    tm = _pick_batch_tile(n, tm)
    n_i = n // tm

    gamma = gamma.reshape(1, hidden)
    beta = beta.reshape(1, hidden)
    b2 = b2.reshape(1, out_dim)

    itemsize = jnp.dtype(x.dtype).itemsize
    w1_resident = in_dim * hidden * itemsize <= max_resident_weight_bytes
    w2_resident = hidden * out_dim * itemsize <= max_resident_weight_bytes

    h_shape = jax.ShapeDtypeStruct((n, hidden), jnp.bfloat16)   # bf16 intermediate
    stats_shape = jax.ShapeDtypeStruct((n_i, 8, hidden), jnp.float32)

    # ---- pass 1: layer1 Linear + per-tile BN partial statistics -------------
    if w1_resident:
        blocks = [((tm, in_dim), x.dtype), ((in_dim, hidden), w1.dtype),
                  ((tm, hidden), jnp.bfloat16), ((8, hidden), jnp.float32)]
        h, stats = pl.pallas_call(
            _layer1_stats_resident_kernel,
            out_shape=(h_shape, stats_shape),
            grid_spec=pltpu.PrefetchScalarGridSpec(
                num_scalar_prefetch=0,
                grid=(n_i,),
                in_specs=[
                    pl.BlockSpec((tm, in_dim), lambda i: (i, 0)),
                    pl.BlockSpec((in_dim, hidden), lambda i: (0, 0)),   # VMEM-resident
                ],
                out_specs=[
                    pl.BlockSpec((tm, hidden), lambda i: (i, 0)),
                    pl.BlockSpec((1, 8, hidden), lambda i: (i, 0, 0)),
                ],
            ),
            compiler_params=pltpu.CompilerParams(
                dimension_semantics=("parallel",),
                vmem_limit_bytes=_vmem_limit_bytes(blocks),
            ),
            cost_estimate=pl.CostEstimate(
                flops=2 * n * in_dim * hidden,
                transcendentals=0,
                bytes_accessed=(4 * (n * in_dim + in_dim * hidden)
                                + 2 * n * hidden + 4 * n_i * 8 * hidden),
            ),
        )(x, w1)
    else:
        assert in_dim % 128 == 0, "in_dim must be a multiple of 128 when K-tiled"
        tk_mult = 256 if (in_dim % 256 == 0 and tk >= 256) else 128
        tk_ = _pick_tile(in_dim, tk, tk_mult)
        n_k = in_dim // tk_
        blocks = [((tm, tk_), x.dtype), ((tk_, hidden), w1.dtype),
                  ((tm, hidden), jnp.bfloat16), ((8, hidden), jnp.float32)]
        scratch = [((tm, hidden), jnp.float32)]
        h, stats = pl.pallas_call(
            _layer1_stats_ktiled_kernel,
            out_shape=(h_shape, stats_shape),
            grid_spec=pltpu.PrefetchScalarGridSpec(
                num_scalar_prefetch=0,
                grid=(n_i, n_k),
                in_specs=[
                    pl.BlockSpec((tm, tk_), lambda i, k: (i, k)),
                    pl.BlockSpec((tk_, hidden), lambda i, k: (k, 0)),
                ],
                out_specs=[
                    pl.BlockSpec((tm, hidden), lambda i, k: (i, 0)),
                    pl.BlockSpec((1, 8, hidden), lambda i, k: (i, 0, 0)),
                ],
                scratch_shapes=[pltpu.VMEM((tm, hidden), jnp.float32)],
            ),
            compiler_params=pltpu.CompilerParams(
                dimension_semantics=("parallel", "arbitrary"),
                vmem_limit_bytes=_vmem_limit_bytes(blocks, scratch),
            ),
            cost_estimate=pl.CostEstimate(
                flops=2 * n * in_dim * hidden,
                transcendentals=0,
                bytes_accessed=(4 * (n * in_dim + n_i * in_dim * hidden)
                                + 2 * n * hidden + 4 * n_i * 8 * hidden),
            ),
        )(x, w1)

    # ---- fold train-mode BatchNorm into one scale/shift (O(hidden) host glue) ----
    hsum = stats[:, 0, :].sum(axis=0, keepdims=True)            # (1, H)
    hsq = stats[:, 1, :].sum(axis=0, keepdims=True)             # (1, H)
    mean = hsum / n
    var = jnp.maximum(hsq / n - mean * mean, 0.0)               # biased var, clamped
    scale = gamma * jax.lax.rsqrt(var + BN_EPS)
    shift = beta - mean * scale

    # ---- pass 2: BN + ReLU + layer2 Linear ----------------------------------
    if w2_resident:
        tn_ = out_dim
    else:
        tn_mult = 256 if (out_dim % 256 == 0 and tn >= 256) else 128
        tn_ = _pick_tile(out_dim, tn, tn_mult)
    n_j = out_dim // tn_

    blocks2 = [((tm, hidden), jnp.bfloat16), ((1, hidden), jnp.float32),
               ((1, hidden), jnp.float32), ((hidden, tn_), w2.dtype),
               ((1, tn_), b2.dtype), ((tm, tn_), jnp.float32)]

    if n_j == 1:
        grid2 = (n_i,)
        in_specs2 = [
            pl.BlockSpec((tm, hidden), lambda i: (i, 0)),
            pl.BlockSpec((1, hidden), lambda i: (0, 0)),
            pl.BlockSpec((1, hidden), lambda i: (0, 0)),
            pl.BlockSpec((hidden, out_dim), lambda i: (0, 0)),   # VMEM-resident
            pl.BlockSpec((1, out_dim), lambda i: (0, 0)),
        ]
        out_specs2 = pl.BlockSpec((tm, out_dim), lambda i: (i, 0))
        dims2 = ("parallel",)
    else:
        grid2 = (n_i, n_j)
        in_specs2 = [
            pl.BlockSpec((tm, hidden), lambda i, j: (i, 0)),
            pl.BlockSpec((1, hidden), lambda i, j: (0, 0)),
            pl.BlockSpec((1, hidden), lambda i, j: (0, 0)),
            pl.BlockSpec((hidden, tn_), lambda i, j: (0, j)),
            pl.BlockSpec((1, tn_), lambda i, j: (0, j)),
        ]
        out_specs2 = pl.BlockSpec((tm, tn_), lambda i, j: (i, j))
        dims2 = ("parallel", "parallel")

    out = pl.pallas_call(
        _bn_relu_layer2_kernel,
        out_shape=jax.ShapeDtypeStruct((n, out_dim), jnp.float32),
        grid_spec=pltpu.PrefetchScalarGridSpec(
            num_scalar_prefetch=0,
            grid=grid2,
            in_specs=in_specs2,
            out_specs=out_specs2,
        ),
        compiler_params=pltpu.CompilerParams(
            dimension_semantics=dims2,
            vmem_limit_bytes=_vmem_limit_bytes(blocks2),
        ),
        cost_estimate=pl.CostEstimate(
            flops=2 * n * hidden * out_dim,
            transcendentals=0,
            bytes_accessed=(2 * n * hidden + 4 * hidden * out_dim
                            + 4 * n * out_dim + 8 * hidden),
        ),
    )(h, scale, shift, w2, b2)

    return out


if __name__ == "__main__":
    # Small, lane-dense shapes consistent with the bottleneck MLP (in -> hidden -> out).
    batch, in_dim, hidden_dim, out_dim = 256, 256, 128, 256

    key = jax.random.PRNGKey(0)
    kx, k1, k2, k3, k4 = jax.random.split(key, 5)
    x = jax.random.normal(kx, (batch, in_dim), jnp.float32)
    w1 = jax.random.normal(k1, (in_dim, hidden_dim), jnp.float32) * 0.02
    b1 = jax.random.normal(k2, (1, hidden_dim), jnp.float32) * 0.01
    gamma = jnp.ones((1, hidden_dim), jnp.float32)   # BN weight init
    beta = jnp.zeros((1, hidden_dim), jnp.float32)   # BN bias init
    w2 = jax.random.normal(k3, (hidden_dim, out_dim), jnp.float32) * 0.02
    b2 = jax.random.normal(k4, (1, out_dim), jnp.float32) * 0.01

    # Pure-JAX f32 reference of the same train-mode forward (includes b1: the kernel
    # omits it because it cancels exactly in the BatchNorm mean subtraction).
    h_ref = x @ w1 + b1
    m = h_ref.mean(axis=0, keepdims=True)
    v = ((h_ref - m) ** 2).mean(axis=0, keepdims=True)
    hn = (h_ref - m) / jnp.sqrt(v + BN_EPS) * gamma + beta
    hn = jnp.maximum(hn, 0.0)
    ref = hn @ w2 + b2

    # Main path: VMEM-resident weights, no K/J tiling.
    fwd = jax.jit(prediction_mlp)
    out = fwd(x, w1, b1, gamma, beta, w2, b2)
    jax.block_until_ready(out)
    assert out.shape == (batch, out_dim)
    err = float(jnp.max(jnp.abs(out - ref)))
    # bf16 MXU matmuls / bf16 intermediate h -> looser tolerance than pure f32.
    assert jnp.allclose(out, ref, atol=2e-2, rtol=2e-2), f"max abs err {err}"

    # Also exercise the large-weight fallback path (K-tiled pass 1, J-tiled pass 2).
    fwd_tiled = jax.jit(functools.partial(
        prediction_mlp, tm=64, tk=128, tn=128, max_resident_weight_bytes=0))
    out_tiled = fwd_tiled(x, w1, b1, gamma, beta, w2, b2)
    jax.block_until_ready(out_tiled)
    err_t = float(jnp.max(jnp.abs(out_tiled - ref)))
    assert jnp.allclose(out_tiled, ref, atol=2e-2, rtol=2e-2), f"max abs err {err_t}"

    print("KERNEL_OK")
</pallas_src>

<mosaic_0001>
module attributes {stable_mosaic.version = 11 : i64} {
  func.func @_bn_relu_layer2_kernel(%arg0: i32, %arg1: memref<128x128xbf16, #tpu.memory_space<vmem>>, %arg2: memref<1x128xf32, #tpu.memory_space<vmem>>, %arg3: memref<1x128xf32, #tpu.memory_space<vmem>>, %arg4: memref<128x256xf32, #tpu.memory_space<vmem>>, %arg5: memref<1x256xf32, #tpu.memory_space<vmem>>, %arg6: memref<128x256xf32, #tpu.memory_space<vmem>>) attributes {dimension_semantics = [#tpu.dimension_semantics<parallel>], iteration_bounds = array<i64: 2>, scalar_prefetch = 0 : i64, scratch_operands = 0 : i64, tpu.core_type = #tpu.core_type<tc>, window_params = [{transform_indices = @transform_0, window_bounds = array<i64: 128, 128>}, {pipeline_mode = #tpu.pipeline_mode<synchronous>, transform_indices = @transform_1, window_bounds = array<i64: 1, 128>}, {pipeline_mode = #tpu.pipeline_mode<synchronous>, transform_indices = @transform_2, window_bounds = array<i64: 1, 128>}, {pipeline_mode = #tpu.pipeline_mode<synchronous>, transform_indices = @transform_3, window_bounds = array<i64: 128, 256>}, {pipeline_mode = #tpu.pipeline_mode<synchronous>, transform_indices = @transform_4, window_bounds = array<i64: 1, 256>}, {transform_indices = @transform_5, window_bounds = array<i64: 128, 256>}]} {
    %c0 = arith.constant 0 : index
    %c0_0 = arith.constant 0 : index
    %0 = vector.load %arg1[%c0, %c0_0] : memref<128x128xbf16, #tpu.memory_space<vmem>>, vector<128x128xbf16>
    %1 = arith.extf %0 : vector<128x128xbf16> to vector<128x128xf32>
    %c0_1 = arith.constant 0 : index
    %c0_2 = arith.constant 0 : index
    %2 = vector.load %arg2[%c0_1, %c0_2] : memref<1x128xf32, #tpu.memory_space<vmem>>, vector<1x128xf32>
    %3 = vector.broadcast %2 : vector<1x128xf32> to vector<128x128xf32>
    %4 = arith.mulf %1, %3 : vector<128x128xf32>
    %c0_3 = arith.constant 0 : index
    %c0_4 = arith.constant 0 : index
    %5 = vector.load %arg3[%c0_3, %c0_4] : memref<1x128xf32, #tpu.memory_space<vmem>>, vector<1x128xf32>
    %6 = vector.broadcast %5 : vector<1x128xf32> to vector<128x128xf32>
    %7 = arith.addf %4, %6 : vector<128x128xf32>
    %cst = arith.constant 0.000000e+00 : f32
    %8 = vector.broadcast %cst : f32 to vector<128x128xf32>
    %9 = arith.maximumf %7, %8 : vector<128x128xf32>
    %10 = arith.truncf %9 : vector<128x128xf32> to vector<128x128xbf16>
    %c0_5 = arith.constant 0 : index
    %c0_6 = arith.constant 0 : index
    %11 = vector.load %arg4[%c0_5, %c0_6] : memref<128x256xf32, #tpu.memory_space<vmem>>, vector<128x256xf32>
    %12 = arith.truncf %11 : vector<128x256xf32> to vector<128x256xbf16>
    %cst_7 = arith.constant dense<0.000000e+00> : vector<128x256xf32>
    %13 = tpu.matmul %10, %12, %cst_7 {dimension_numbers = #tpu.dot_dimension_numbers<[1], [0], [0], [1], [0, 0, 1, 1], [], []>} : vector<128x128xbf16>, vector<128x256xbf16>, vector<128x256xf32> -> vector<128x256xf32>
    %c0_8 = arith.constant 0 : index
    %c0_9 = arith.constant 0 : index
    %14 = vector.load %arg5[%c0_8, %c0_9] : memref<1x256xf32, #tpu.memory_space<vmem>>, vector<1x256xf32>
    %15 = vector.broadcast %14 : vector<1x256xf32> to vector<128x256xf32>
    %16 = arith.addf %13, %15 : vector<128x256xf32>
    %c0_10 = arith.constant 0 : index
    %c0_11 = arith.constant 0 : index
    %17 = vector.load %arg6[%c0_10, %c0_11] : memref<128x256xf32, #tpu.memory_space<vmem>>, vector<128x256xf32>
    tpu.vector_store %arg6[%c0_10, %c0_11], %16 {strides = array<i32>} : memref<128x256xf32, #tpu.memory_space<vmem>>, vector<128x256xf32>,
    return
  }
  func.func @transform_0(%arg0: i32) -> (i32, i32) {
    %c0_i32 = arith.constant 0 : i32
    %c0_i32_0 = arith.constant 0 : i32
    return %arg0, %c0_i32 : i32, i32
  }
  func.func @transform_1(%arg0: i32) -> (i32, i32) {
    %c0_i32 = arith.constant 0 : i32
    %c0_i32_0 = arith.constant 0 : i32
    %c0_i32_1 = arith.constant 0 : i32
    return %c0_i32, %c0_i32_0 : i32, i32
  }
  func.func @transform_2(%arg0: i32) -> (i32, i32) {
    %c0_i32 = arith.constant 0 : i32
    %c0_i32_0 = arith.constant 0 : i32
    %c0_i32_1 = arith.constant 0 : i32
    return %c0_i32, %c0_i32_0 : i32, i32
  }
  func.func @transform_3(%arg0: i32) -> (i32, i32) {
    %c0_i32 = arith.constant 0 : i32
    %c0_i32_0 = arith.constant 0 : i32
    %c0_i32_1 = arith.constant 0 : i32
    return %c0_i32, %c0_i32_0 : i32, i32
  }
  func.func @transform_4(%arg0: i32) -> (i32, i32) {
    %c0_i32 = arith.constant 0 : i32
    %c0_i32_0 = arith.constant 0 : i32
    %c0_i32_1 = arith.constant 0 : i32
    return %c0_i32, %c0_i32_0 : i32, i32
  }
  func.func @transform_5(%arg0: i32) -> (i32, i32) {
    %c0_i32 = arith.constant 0 : i32
    %c0_i32_0 = arith.constant 0 : i32
    return %arg0, %c0_i32 : i32, i32
  }
}

module attributes {stable_mosaic.version = 11 : i64} {
  func.func @_layer1_stats_resident_kernel(%arg0: i32, %arg1: memref<128x256xf32, #tpu.memory_space<vmem>>, %arg2: memref<256x128xf32, #tpu.memory_space<vmem>>, %arg3: memref<128x128xbf16, #tpu.memory_space<vmem>>, %arg4: memref<1x8x128xf32, #tpu.memory_space<vmem>>) attributes {dimension_semantics = [#tpu.dimension_semantics<parallel>], iteration_bounds = array<i64: 2>, scalar_prefetch = 0 : i64, scratch_operands = 0 : i64, tpu.core_type = #tpu.core_type<tc>, window_params = [{transform_indices = @transform_0, window_bounds = array<i64: 128, 256>}, {pipeline_mode = #tpu.pipeline_mode<synchronous>, transform_indices = @transform_1, window_bounds = array<i64: 256, 128>}, {transform_indices = @transform_2, window_bounds = array<i64: 128, 128>}, {transform_indices = @transform_3, window_bounds = array<i64: 1, 8, 128>}]} {
    %c0 = arith.constant 0 : index
    %c0_0 = arith.constant 0 : index
    %0 = vector.load %arg1[%c0, %c0_0] : memref<128x256xf32, #tpu.memory_space<vmem>>, vector<128x256xf32>
    %1 = arith.truncf %0 : vector<128x256xf32> to vector<128x256xbf16>
    %c0_1 = arith.constant 0 : index
    %c0_2 = arith.constant 0 : index
    %2 = vector.load %arg2[%c0_1, %c0_2] : memref<256x128xf32, #tpu.memory_space<vmem>>, vector<256x128xf32>
    %3 = arith.truncf %2 : vector<256x128xf32> to vector<256x128xbf16>
    %cst = arith.constant dense<0.000000e+00> : vector<128x128xf32>
    %4 = tpu.matmul %1, %3, %cst {dimension_numbers = #tpu.dot_dimension_numbers<[1], [0], [0], [1], [0, 0, 1, 1], [], []>} : vector<128x256xbf16>, vector<256x128xbf16>, vector<128x128xf32> -> vector<128x128xf32>
    %5 = arith.truncf %4 : vector<128x128xf32> to vector<128x128xbf16>
    %c0_3 = arith.constant 0 : index
    %c0_4 = arith.constant 0 : index
    %6 = vector.load %arg3[%c0_3, %c0_4] : memref<128x128xbf16, #tpu.memory_space<vmem>>, vector<128x128xbf16>
    tpu.vector_store %arg3[%c0_3, %c0_4], %5 {strides = array<i32>} : memref<128x128xbf16, #tpu.memory_space<vmem>>, vector<128x128xbf16>,
    %cst_5 = arith.constant dense<0.000000e+00> : vector<128xf32>
    %7 = vector.multi_reduction <add>, %4, %cst_5 [0] : vector<128x128xf32> to vector<128xf32>
    %8 = vector.shape_cast %7 : vector<128xf32> to vector<1x128xf32>
    %9 = arith.mulf %4, %4 : vector<128x128xf32>
    %cst_6 = arith.constant dense<0.000000e+00> : vector<128xf32>
    %10 = vector.multi_reduction <add>, %9, %cst_6 [0] : vector<128x128xf32> to vector<128xf32>
    %11 = vector.shape_cast %10 : vector<128xf32> to vector<1x128xf32>
    %12 = tpu.iota {dimensions = array<i32: 0>} : vector<8x128xi32>
    %13 = vector.shape_cast %8 : vector<1x128xf32> to vector<1x128xf32>
    %14 = vector.broadcast %13 : vector<1x128xf32> to vector<8x128xf32>
    %15 = vector.shape_cast %11 : vector<1x128xf32> to vector<1x128xf32>
    %16 = vector.broadcast %15 : vector<1x128xf32> to vector<8x128xf32>
    %c0_i32 = arith.constant 0 : i32
    %17 = vector.broadcast %c0_i32 : i32 to vector<8x128xi32>
    %18 = arith.cmpi eq, %12, %17 : vector<8x128xi32>
    %19 = arith.select %18, %14, %16 : vector<8x128xi1>, vector<8x128xf32>
    %20 = vector.shape_cast %19 : vector<8x128xf32> to vector<1x8x128xf32>
    %c0_7 = arith.constant 0 : index
    %c0_8 = arith.constant 0 : index
    %c0_9 = arith.constant 0 : index
    %21 = vector.load %arg4[%c0_7, %c0_8, %c0_9] : memref<1x8x128xf32, #tpu.memory_space<vmem>>, vector<1x8x128xf32>
    tpu.vector_store %arg4[%c0_7, %c0_8, %c0_9], %20 {strides = array<i32>} : memref<1x8x128xf32, #tpu.memory_space<vmem>>, vector<1x8x128xf32>,
    return
  }
  func.func @transform_0(%arg0: i32) -> (i32, i32) {
    %c0_i32 = arith.constant 0 : i32
    %c0_i32_0 = arith.constant 0 : i32
    return %arg0, %c0_i32 : i32, i32
  }
  func.func @transform_1(%arg0: i32) -> (i32, i32) {
    %c0_i32 = arith.constant 0 : i32
    %c0_i32_0 = arith.constant 0 : i32
    %c0_i32_1 = arith.constant 0 : i32
    return %c0_i32, %c0_i32_0 : i32, i32
  }
  func.func @transform_2(%arg0: i32) -> (i32, i32) {
    %c0_i32 = arith.constant 0 : i32
    %c0_i32_0 = arith.constant 0 : i32
    return %arg0, %c0_i32 : i32, i32
  }
  func.func @transform_3(%arg0: i32) -> (i32, i32, i32) {
    %c0_i32 = arith.constant 0 : i32
    %c0_i32_0 = arith.constant 0 : i32
    %c0_i32_1 = arith.constant 0 : i32
    return %arg0, %c0_i32, %c0_i32_0 : i32, i32, i32
  }
}

</mosaic_0001>

<llo_original>
// kernel: prediction_mlp.2
$region0: #{prediction_mlp.2}
  #allocation0 [shape = 'u32[]', space=smem, size = 0x4, offset = 0x4, fixed_abs, tag = 'smem constant byte address 0x4 - core index']
  #allocation1 [shape = 'u32[144,128]{1,0:T(1,128)}', space=vmem, size = 0x12000, scoped, tag = 'internal scratch']
  %s0 = inlined_call_operand.hbm [shape: f32[256,256], index: 0, kind: input, shape index: {}]
  %s1 = inlined_call_operand.hbm [shape: f32[256,128], index: 1, kind: input, shape index: {}]
  %s2 = inlined_call_operand.vmem [shape: bf16[256,128], index: 2, kind: output, shape index: {0}]
  %s3 = inlined_call_operand.vmem [shape: f32[2,8,128], index: 3, kind: output, shape index: {1}]
  %4 = xla_tuple %s2, %s3
  %s5 = sld [smem:[#allocation0]]
  $region57: #{prediction_mlp.2} parent=0
    _
  %s7 = ssub.s32 1, %s5
  %s8 = scalar_select 0, %s7, %s5
  $region1: #{prediction_mlp.2} parent=0
    #allocation2 [shape = 'u8[262144]{0}', space=vmem, size = 0x40000, scoped, tag = 'input window, operand 0']
    #allocation3 [shape = 's32[2]{0}', space=sflag, size = 0x8, scoped, tag = 'scoped memory for prediction_mlp.2']
    #allocation4 [shape = 'u8[131072]{0}', space=vmem, size = 0x20000, scoped, tag = 'input window, operand 1, single buffered']
    #allocation5 [shape = 's32[1]{0}', space=sflag, size = 0x4, scoped, tag = 'scoped memory for prediction_mlp.2']
    %9 = vsyncpa [#allocation3], 0
    %s10 = scalar_lea.sflag [#allocation3], 1
    %11 = vsyncpa %s10, 0
    %12 = vsyncpa [#allocation5], 0
    loop: start=0, step=1, limit=4
    $region2: #{prediction_mlp.2} parent=1 // loop_pre_header
      _
    $region3: #{prediction_mlp.2} parent=1 // loop_header
      %s14 = sphi 0, %s18
      %p15 = scmp.ge.s32.totalorder %s14, 4
      %s24 = sphi 0, %s26
      %s27 = sphi 0, %s24
      %s28 = sphi 0, %s27
      %s44 = sphi 0, %s28
      %s48 = sphi 0, %s48
      %s50 = sphi 0, %s48
      %s51 = sphi 0, %s50
      %s65 = sphi 0, %s51
      %s71 = sphi 0, %s73
      %s74 = sphi 0, %s71
      %s75 = sphi 0, %s74
      %s91 = sphi 0, %s75
      %s97 = sphi 0, %s99
      %s100 = sphi 0, %s97
      %s101 = sphi 0, %s100
      %s117 = sphi 0, %s101
    $region4: #{prediction_mlp.2} parent=1 // loop_header_branch
      %17 = sbr.rel (%p15) target = $region8
    $region5: #{prediction_mlp.2} parent=1 // loop_body
      %s19 = ssub.s32 %s14, 1
      %s20 = ssub.s32 %s14, 2
      %s21 = sadd.s32 %s14, 1
      %s22 = ssub.s32 %s14, %s21
      %p23 = scmp.eq.s32.totalorder %s22, 0
      %s25 = sadd.s32 %s24, 1
      %s26 = scalar_select %p23, %s24, %s25
      %p29 = pneg %p23
      %p30 = scmp.eq.s32.totalorder %s14, 1
      %p31 = por %p29, %p30
      %p32 = scmp.ne.s32.totalorder %s24, %s27
      %p33 = scmp.eq.s32.totalorder %s14, 0
      %p34 = por %p32, %p33
      %p35 = scmp.ne.s32.totalorder %s24, %s27
      %p36 = scmp.eq.s32.totalorder %s19, 1
      %p37 = por %p35, %p36
      %p38 = scmp.ne.s32.totalorder %s27, %s28
      %p39 = scmp.eq.s32.totalorder %s19, 0
      %p40 = por %p38, %p39
      %p41 = scmp.ne.s32.totalorder %s27, %s28
      %p42 = scmp.eq.s32.totalorder %s20, 1
      %p43 = por %p41, %p42
      %p45 = scmp.ne.s32.totalorder %s28, %s44
      %p46 = scmp.eq.s32.totalorder %s20, 0
      %p47 = por %p45, %p46
      %s49 = sadd.s32 %s48, 1
      %p52 = scmp.eq.s32.totalorder %s14, 1
      %p53 = scmp.ne.s32.totalorder %s48, %s50
      %p54 = scmp.eq.s32.totalorder %s14, 0
      %p55 = por %p53, %p54
      %p56 = scmp.ne.s32.totalorder %s48, %s50
      %p57 = scmp.eq.s32.totalorder %s19, 1
      %p58 = por %p56, %p57
      %p59 = scmp.ne.s32.totalorder %s50, %s51
      %p60 = scmp.eq.s32.totalorder %s19, 0
      %p61 = por %p59, %p60
      %p62 = scmp.ne.s32.totalorder %s50, %s51
      %p63 = scmp.eq.s32.totalorder %s20, 1
      %p64 = por %p62, %p63
      %p66 = scmp.ne.s32.totalorder %s51, %s65
      %p67 = scmp.eq.s32.totalorder %s20, 0
      %p68 = por %p66, %p67
      %s69 = ssub.s32 %s14, %s21
      %p70 = scmp.eq.s32.totalorder %s69, 0
      %s72 = sadd.s32 %s71, 1
      %s73 = scalar_select %p70, %s71, %s72
      %p76 = pneg %p70
      %p77 = scmp.eq.s32.totalorder %s14, 1
      %p78 = por %p76, %p77
      %p79 = scmp.ne.s32.totalorder %s71, %s74
      %p80 = scmp.eq.s32.totalorder %s14, 0
      %p81 = por %p79, %p80
      %p82 = scmp.ne.s32.totalorder %s71, %s74
      %p83 = scmp.eq.s32.totalorder %s19, 1
      %p84 = por %p82, %p83
      %p85 = scmp.ne.s32.totalorder %s74, %s75
      %p86 = scmp.eq.s32.totalorder %s19, 0
      %p87 = por %p85, %p86
      %p88 = scmp.ne.s32.totalorder %s74, %s75
      %p89 = scmp.eq.s32.totalorder %s20, 1
      %p90 = por %p88, %p89
      %p92 = scmp.ne.s32.totalorder %s75, %s91
      %p93 = scmp.eq.s32.totalorder %s20, 0
      %p94 = por %p92, %p93
      %s95 = ssub.s32 %s14, %s21
      %p96 = scmp.eq.s32.totalorder %s95, 0
      %s98 = sadd.s32 %s97, 1
      %s99 = scalar_select %p96, %s97, %s98
      %p102 = pneg %p96
      %p103 = scmp.eq.s32.totalorder %s14, 1
      %p104 = por %p102, %p103
      %p105 = scmp.ne.s32.totalorder %s97, %s100
      %p106 = scmp.eq.s32.totalorder %s14, 0
      %p107 = por %p105, %p106
      %p108 = scmp.ne.s32.totalorder %s97, %s100
      %p109 = scmp.eq.s32.totalorder %s19, 1
      %p110 = por %p108, %p109
      %p111 = scmp.ne.s32.totalorder %s100, %s101
      %p112 = scmp.eq.s32.totalorder %s19, 0
      %p113 = por %p111, %p112
      %p114 = scmp.ne.s32.totalorder %s100, %s101
      %p115 = scmp.eq.s32.totalorder %s20, 1
      %p116 = por %p114, %p115
      %p118 = scmp.ne.s32.totalorder %s101, %s117
      %p119 = scmp.eq.s32.totalorder %s20, 0
      %p120 = por %p118, %p119
      %p121 = scmp.le.s32.totalorder 1, %s14
      %p122 = scmp.lt.s32.totalorder %s14, 3
      %p123 = pnand %p121, %p122
      %p124 = pneg %p123
      // Predicated region
      $region9: #{prediction_mlp.2} parent=5 // pred_check
        _
      $region10: #{prediction_mlp.2} parent=5 // pred_check_branch
        %126 = sbr.rel (%p123) target = $region12
      $region11: #{prediction_mlp.2} parent=5 // pred_region
        %s127 = ssub.s32 %s14, 1
        // Predicated region
        $region13: #{prediction_mlp.2} parent=11 // pred_check
          %p128 = pneg %p61
        $region14: #{prediction_mlp.2} parent=11 // pred_check_branch
          %130 = sbr.rel (%p128) target = $region16
        $region15: #{prediction_mlp.2} parent=11 // pred_region
          %s132 = ssub.s32 4096, 4096
          %133 = vsyncadd [#allocation5], %s132
          %s134 = sshll.u32 [#allocation4], 4
          %s135 = int_to_ptr.vmem [resolvable:$true] %s134
          %140 = dma.hbm_to_vmem [thread:$0]  %s1, 4096, %s135, [#allocation5], 128, 128, 8
        $region16: #{prediction_mlp.2} parent=11 // pred_fallthru
          _
      $region12: #{prediction_mlp.2} parent=5 // pred_fallthru
        _
      %p141 = scmp.lt.s32.totalorder %s14, 2
      // Predicated region
      $region17: #{prediction_mlp.2} parent=5 // pred_check
        %p142 = pneg %p141
      $region18: #{prediction_mlp.2} parent=5 // pred_check_branch
        %144 = sbr.rel (%p142) target = $region20
      $region19: #{prediction_mlp.2} parent=5 // pred_region
        // Predicated region
        $region21: #{prediction_mlp.2} parent=19 // pred_check
          %p145 = pneg %p34
        $region22: #{prediction_mlp.2} parent=19 // pred_check_branch
          %147 = sbr.rel (%p145) target = $region24
        $region23: #{prediction_mlp.2} parent=19 // pred_region
          %s148 = sand.u32 %s24, 1
          %s149 = scalar_lea.sflag [#allocation3], %s148
          %s150 = sand.u32 %s24, 1
          %s151 = smul.addr %s150, 256
          %s152 = scalar_lea.vmem [#allocation2], %s151
          %s153 = smul.u32 16, %s14
          %s155 = ssub.s32 4096, 4096
          %156 = vsyncadd %s149, %s155
          %s157 = smul.addr %s153, 2
          %s158 = smul.addr %s157, 128
          %s159 = scalar_lea.hbm %s0, %s158
          %s160 = sshll.u32 %s152, 4
          %s161 = int_to_ptr.vmem [resolvable:$true] %s160
          %166 = dma.hbm_to_vmem [thread:$0]  %s159, 4096, %s161, %s149, 256, 256, 16
        $region24: #{prediction_mlp.2} parent=19 // pred_fallthru
          _
      $region20: #{prediction_mlp.2} parent=5 // pred_fallthru
        _
      %p167 = scmp.le.s32.totalorder 1, %s14
      %p168 = scmp.lt.s32.totalorder %s14, 3
      %p169 = pnand %p167, %p168
      %p170 = pneg %p169
      // Predicated region
      $region25: #{prediction_mlp.2} parent=5 // pred_check
        _
      $region26: #{prediction_mlp.2} parent=5 // pred_check_branch
        %172 = sbr.rel (%p169) target = $region28
      $region27: #{prediction_mlp.2} parent=5 // pred_region
        %s173 = ssub.s32 %s14, 1
        %s174 = sand.u32 %s27, 1
        %s175 = scalar_lea.sflag [#allocation3], %s174
        %s176 = sand.u32 %s27, 1
        %s177 = smul.addr %s176, 256
        %s178 = scalar_lea.vmem [#allocation2], %s177
        // Predicated region
        $region29: #{prediction_mlp.2} parent=27 // pred_check
          %p179 = pneg %p40
        $region30: #{prediction_mlp.2} parent=27 // pred_check_branch
          %181 = sbr.rel (%p179) target = $region32
        $region31: #{prediction_mlp.2} parent=27 // pred_region
          %182 = dma.done %s175, 4096
        $region32: #{prediction_mlp.2} parent=27 // pred_fallthru
          _
        // Predicated region
        $region33: #{prediction_mlp.2} parent=27 // pred_check
          %p183 = pneg %p61
        $region34: #{prediction_mlp.2} parent=27 // pred_check_branch
          %185 = sbr.rel (%p183) target = $region36
        $region35: #{prediction_mlp.2} parent=27 // pred_region
          %186 = dma.done [#allocation5], 4096
        $region36: #{prediction_mlp.2} parent=27 // pred_fallthru
          _
        %s187 = sand.u32 %s27, 1
        %s188 = scalar_lea.sflag [#allocation3], %s187
        %s189 = sand.u32 %s27, 1
        %s190 = smul.addr %s189, 256
        %s191 = scalar_lea.vmem [#allocation2], %s190
        %p192 = pneg %p40
        %p193 = pneg %p37
        %p194 = pneg %p61
        %p195 = pneg %p58
        %p196 = pneg %p87
        %p197 = pneg %p84
        %s198 = smul.u32 16, %s19
        %p199 = scmp.lt.s32.totalorder %s198, 31
        %s200 = scalar_select %p199, %s198, 31
        %s201 = smul.addr %s200, 4
        %s202 = scalar_lea.vmem %s2, %s201
        %p203 = pneg %p113
        %p204 = pneg %p110
        %p205 = scmp.lt.s32.totalorder %s19, 1
        %s206 = scalar_select %p205, %s19, 1
        %s207 = smul.addr %s206, 8
        %s208 = scalar_lea.vmem %s3, %s207
        %s209 = smul.u32 16, %s19
        %s210 = smul.u32 16, %s19
        %p211 = scmp.lt.s32.totalorder %s210, 31
        %s212 = scalar_select %p211, %s210, 31
        %s213 = smul.addr %s212, 4
        %s214 = scalar_lea.vmem %s2, %s213
        %s215 = smul.u32 16, %s19
        %p216 = scmp.lt.s32.totalorder %s19, 1
        %s217 = scalar_select %p216, %s19, 1
        %s218 = smul.addr %s217, 8
        %s219 = scalar_lea.vmem %s3, %s218
        %v221 = vld [vmem:[%s178] sm:$0xff]
        %v222 = vld [vmem:[%s178 + $0x8] sm:$0xff]
        %v223 = vld [vmem:[%s178 + $0x10] sm:$0xff]
        %v224 = vld [vmem:[%s178 + $0x18] sm:$0xff]
        %v225 = vld [vmem:[%s178 + $0x20] sm:$0xff]
        %v226 = vld [vmem:[%s178 + $0x28] sm:$0xff]
        %v227 = vld [vmem:[%s178 + $0x30] sm:$0xff]
        %v228 = vld [vmem:[%s178 + $0x38] sm:$0xff]
        %v229 = vld [vmem:[%s178 + $0x40] sm:$0xff]
        %v230 = vld [vmem:[%s178 + $0x48] sm:$0xff]
        %v231 = vld [vmem:[%s178 + $0x50] sm:$0xff]
        %v232 = vld [vmem:[%s178 + $0x58] sm:$0xff]
        %v233 = vld [vmem:[%s178 + $0x60] sm:$0xff]
        %v234 = vld [vmem:[%s178 + $0x68] sm:$0xff]
        %v235 = vld [vmem:[%s178 + $0x70] sm:$0xff]
        %v236 = vld [vmem:[%s178 + $0x78] sm:$0xff]
        %v237 = vld [vmem:[%s178 + $0x80] sm:$0xff]
        %v238 = vld [vmem:[%s178 + $0x88] sm:$0xff]
        %v239 = vld [vmem:[%s178 + $0x90] sm:$0xff]
        %v240 = vld [vmem:[%s178 + $0x98] sm:$0xff]
        %v241 = vld [vmem:[%s178 + $0xa0] sm:$0xff]
        %v242 = vld [vmem:[%s178 + $0xa8] sm:$0xff]
        %v243 = vld [vmem:[%s178 + $0xb0] sm:$0xff]
        %v244 = vld [vmem:[%s178 + $0xb8] sm:$0xff]
        %v245 = vld [vmem:[%s178 + $0xc0] sm:$0xff]
        %v246 = vld [vmem:[%s178 + $0xc8] sm:$0xff]
        %v247 = vld [vmem:[%s178 + $0xd0] sm:$0xff]
        %v248 = vld [vmem:[%s178 + $0xd8] sm:$0xff]
        %v249 = vld [vmem:[%s178 + $0xe0] sm:$0xff]
        %v250 = vld [vmem:[%s178 + $0xe8] sm:$0xff]
        %v251 = vld [vmem:[%s178 + $0xf0] sm:$0xff]
        %v252 = vld [vmem:[%s178 + $0xf8] sm:$0xff]
        %v253 = vpack.c.bf16 %v223, %v221
        %v254 = vpack.c.bf16 %v224, %v222
        %v255 = vpack.c.bf16 %v227, %v225
        %v256 = vpack.c.bf16 %v228, %v226
        %v257 = vpack.c.bf16 %v231, %v229
        %v258 = vpack.c.bf16 %v232, %v230
        %v259 = vpack.c.bf16 %v235, %v233
        %v260 = vpack.c.bf16 %v236, %v234
        %v261 = vpack.c.bf16 %v239, %v237
        %v262 = vpack.c.bf16 %v240, %v238
        %v263 = vpack.c.bf16 %v243, %v241
        %v264 = vpack.c.bf16 %v244, %v242
        %v265 = vpack.c.bf16 %v247, %v245
        %v266 = vpack.c.bf16 %v248, %v246
        %v267 = vpack.c.bf16 %v251, %v249
        %v268 = vpack.c.bf16 %v252, %v250
        %v269 = vld [vmem:[#allocation4] sm:$0xff]
        %v270 = vld [vmem:[#allocation4 + $0x8] sm:$0xff]
        %v271 = vld [vmem:[#allocation4 + $0x10] sm:$0xff]
        %v272 = vld [vmem:[#allocation4 + $0x18] sm:$0xff]
        %v273 = vld [vmem:[#allocation4 + $0x20] sm:$0xff]
        %v274 = vld [vmem:[#allocation4 + $0x28] sm:$0xff]
        %v275 = vld [vmem:[#allocation4 + $0x30] sm:$0xff]
        %v276 = vld [vmem:[#allocation4 + $0x38] sm:$0xff]
        %v277 = vld [vmem:[#allocation4 + $0x40] sm:$0xff]
        %v278 = vld [vmem:[#allocation4 + $0x48] sm:$0xff]
        %v279 = vld [vmem:[#allocation4 + $0x50] sm:$0xff]
        %v280 = vld [vmem:[#allocation4 + $0x58] sm:$0xff]
        %v281 = vld [vmem:[#allocation4 + $0x60] sm:$0xff]
        %v282 = vld [vmem:[#allocation4 + $0x68] sm:$0xff]
        %v283 = vld [vmem:[#allocation4 + $0x70] sm:$0xff]
        %v284 = vld [vmem:[#allocation4 + $0x78] sm:$0xff]
        %v285 = vld [vmem:[#allocation4 + $0x80] sm:$0xff]
        %v286 = vld [vmem:[#allocation4 + $0x88] sm:$0xff]
        %v287 = vld [vmem:[#allocation4 + $0x90] sm:$0xff]
        %v288 = vld [vmem:[#allocation4 + $0x98] sm:$0xff]
        %v289 = vld [vmem:[#allocation4 + $0xa0] sm:$0xff]
        %v290 = vld [vmem:[#allocation4 + $0xa8] sm:$0xff]
        %v291 = vld [vmem:[#allocation4 + $0xb0] sm:$0xff]
        %v292 = vld [vmem:[#allocation4 + $0xb8] sm:$0xff]
        %v293 = vld [vmem:[#allocation4 + $0xc0] sm:$0xff]
        %v294 = vld [vmem:[#allocation4 + $0xc8] sm:$0xff]
        %v295 = vld [vmem:[#allocation4 + $0xd0] sm:$0xff]
        %v296 = vld [vmem:[#allocation4 + $0xd8] sm:$0xff]
        %v297 = vld [vmem:[#allocation4 + $0xe0] sm:$0xff]
        %v298 = vld [vmem:[#allocation4 + $0xe8] sm:$0xff]
        %v299 = vld [vmem:[#allocation4 + $0xf0] sm:$0xff]
        %v300 = vld [vmem:[#allocation4 + $0xf8] sm:$0xff]
        %v301 = vpack.c.bf16 %v270, %v269
        %v302 = vpack.c.bf16 %v272, %v271
        %v303 = vpack.c.bf16 %v274, %v273
        %v304 = vpack.c.bf16 %v276, %v275
        %v305 = vpack.c.bf16 %v278, %v277
        %v306 = vpack.c.bf16 %v280, %v279
        %v307 = vpack.c.bf16 %v282, %v281
        %v308 = vpack.c.bf16 %v284, %v283
        %v309 = vpack.c.bf16 %v286, %v285
        %v310 = vpack.c.bf16 %v288, %v287
        %v311 = vpack.c.bf16 %v290, %v289
        %v312 = vpack.c.bf16 %v292, %v291
        %v313 = vpack.c.bf16 %v294, %v293
        %v314 = vpack.c.bf16 %v296, %v295
        %v315 = vpack.c.bf16 %v298, %v297
        %v316 = vpack.c.bf16 %v300, %v299
        %317 = vmatprep.subr.bf16.mxu0 0
        %318 = vmatpush1.bf16.msra.mxu0 %v308
        %319 = vmatprep.subr.bf16.mxu0 0
        %320 = vmatpush1.bf16.msra.mxu0 %v307
        %321 = vmatprep.subr.bf16.mxu0 0
        %322 = vmatpush1.bf16.msra.mxu0 %v306
        %323 = vmatprep.subr.bf16.mxu0 0
        %324 = vmatpush1.bf16.msra.mxu0 %v305
        %325 = vmatprep.subr.bf16.mxu0 0
        %326 = vmatpush1.bf16.msra.mxu0 %v304
        %327 = vmatprep.subr.bf16.mxu0 0
        %328 = vmatpush1.bf16.msra.mxu0 %v303
        %329 = vmatprep.subr.bf16.mxu0 0
        %330 = vmatpush1.bf16.msra.mxu0 %v302
        %331 = vmatprep.subr.bf16.mxu0 0
        %332 = vmatpush1.bf16.msra.mxu0 %v301
        %333 = vmatprep.subr.bf16.mxu0 0
        %334 = vmatpush2.bf16.msra.mxu0 %v316
        %335 = vmatprep.subr.bf16.mxu0 0
        %336 = vmatpush2.bf16.msra.mxu0 %v315
        %337 = vmatprep.subr.bf16.mxu0 0
        %338 = vmatpush2.bf16.msra.mxu0 %v314
        %339 = vmatprep.subr.bf16.mxu0 0
        %340 = vmatpush2.bf16.msra.mxu0 %v313
        %341 = vmatprep.subr.bf16.mxu0 0
        %342 = vmatpush2.bf16.msra.mxu0 %v312
        %343 = vmatprep.subr.bf16.mxu0 0
        %344 = vmatpush2.bf16.msra.mxu0 %v311
        %345 = vmatprep.subr.bf16.mxu0 0
        %346 = vmatpush2.bf16.msra.mxu0 %v310
        %347 = vmatprep.subr.bf16.mxu0 0
        %348 = vmatpush2.bf16.msra.mxu0 %v309
        %349 = vmatprep.mubr.bf16.mxu0 %v254
        %350 = vmatmul.mubr.bf16.gmra.mxu0 %v253
        %v351 = vpop.f32.mrf.mxu0
        %v352 = vadd.f32 0.0, %v351
        %v353 = vpop.f32.mrf.mxu0
        %v354 = vpop.f32.mrf.mxu0
        %v355 = vadd.f32 0.0, %v354
        %v356 = vpop.f32.mrf.mxu0
        %357 = vmatprep.mubr.bf16.mxu0 %v256
        %358 = vmatmul.mubr.bf16.gmra.mxu0 %v255
        %v359 = vpop.f32.mrf.mxu0
        %v360 = vadd.f32 0.0, %v359
        %v361 = vpop.f32.mrf.mxu0
        %v362 = vpop.f32.mrf.mxu0
        %v363 = vadd.f32 0.0, %v362
        %v364 = vpop.f32.mrf.mxu0
        %365 = vmatprep.mubr.bf16.mxu0 %v258
        %366 = vmatmul.mubr.bf16.gmra.mxu0 %v257
        %v367 = vpop.f32.mrf.mxu0
        %v368 = vadd.f32 0.0, %v367
        %v369 = vpop.f32.mrf.mxu0
        %v370 = vpop.f32.mrf.mxu0
        %v371 = vadd.f32 0.0, %v370
        %v372 = vpop.f32.mrf.mxu0
        %373 = vmatprep.mubr.bf16.mxu0 %v260
        %374 = vmatmul.mubr.bf16.gmra.mxu0 %v259
        %v375 = vpop.f32.mrf.mxu0
        %v376 = vadd.f32 0.0, %v375
        %v377 = vpop.f32.mrf.mxu0
        %v378 = vpop.f32.mrf.mxu0
        %v379 = vadd.f32 0.0, %v378
        %v380 = vpop.f32.mrf.mxu0
        %381 = vmatprep.mubr.bf16.mxu0 %v262
        %382 = vmatmul.mubr.bf16.gmra.mxu0 %v261
        %v383 = vpop.f32.mrf.mxu0
        %v384 = vadd.f32 0.0, %v383
        %v385 = vpop.f32.mrf.mxu0
        %v386 = vpop.f32.mrf.mxu0
        %v387 = vadd.f32 0.0, %v386
        %v388 = vpop.f32.mrf.mxu0
        %389 = vmatprep.mubr.bf16.mxu0 %v264
        %390 = vmatmul.mubr.bf16.gmra.mxu0 %v263
        %v391 = vpop.f32.mrf.mxu0
        %v392 = vadd.f32 0.0, %v391
        %v393 = vpop.f32.mrf.mxu0
        %v394 = vpop.f32.mrf.mxu0
        %v395 = vadd.f32 0.0, %v394
        %v396 = vpop.f32.mrf.mxu0
        %397 = vmatprep.mubr.bf16.mxu0 %v266
        %398 = vmatmul.mubr.bf16.gmra.mxu0 %v265
        %v399 = vpop.f32.mrf.mxu0
        %v400 = vadd.f32 0.0, %v399
        %v401 = vpop.f32.mrf.mxu0
        %v402 = vpop.f32.mrf.mxu0
        %v403 = vadd.f32 0.0, %v402
        %v404 = vpop.f32.mrf.mxu0
        %405 = vmatprep.mubr.bf16.mxu0 %v268
        %406 = vmatmul.mubr.bf16.gmra.mxu0 %v267
        %v407 = vpop.f32.mrf.mxu0
        %v408 = vadd.f32 0.0, %v407
        %v409 = vpop.f32.mrf.mxu0
        %v410 = vpop.f32.mrf.mxu0
        %v411 = vadd.f32 0.0, %v410
        %v412 = vpop.f32.mrf.mxu0
        %413 = vdwg.mxu0
        %v414 = vpack.c.bf16 %v355, %v352
        %v415 = vpack.c.bf16 %v363, %v360
        %v416 = vpack.c.bf16 %v371, %v368
        %v417 = vpack.c.bf16 %v379, %v376
        %v418 = vpack.c.bf16 %v387, %v384
        %v419 = vpack.c.bf16 %v395, %v392
        %v420 = vpack.c.bf16 %v403, %v400
        %v421 = vpack.c.bf16 %v411, %v408
        %v430 = vunpack.c.l.b16 %v414
        %v431 = vunpack.c.h.b16 %v414
        %v432 = vunpack.c.l.b16 %v415
        %v433 = vunpack.c.h.b16 %v415
        %v434 = vunpack.c.l.b16 %v416
        %v435 = vunpack.c.h.b16 %v416
        %v436 = vunpack.c.l.b16 %v417
        %v437 = vunpack.c.h.b16 %v417
        %v438 = vunpack.c.l.b16 %v418
        %v439 = vunpack.c.h.b16 %v418
        %v440 = vunpack.c.l.b16 %v419
        %v441 = vunpack.c.h.b16 %v419
        %v442 = vunpack.c.l.b16 %v420
        %v443 = vunpack.c.h.b16 %v420
        %v444 = vunpack.c.l.b16 %v421
        %v445 = vunpack.c.h.b16 %v421
        %v446 = vpack.c.b16 %v430, %v430
        %v447 = vpack.c.b16 %v431, %v431
        %v448 = vpack.c.b16 %v432, %v432
        %v449 = vpack.c.b16 %v433, %v433
        %v450 = vpack.c.b16 %v434, %v434
        %v451 = vpack.c.b16 %v435, %v435
        %v452 = vpack.c.b16 %v436, %v436
        %v453 = vpack.c.b16 %v437, %v437
        %v454 = vpack.c.b16 %v438, %v438
        %v455 = vpack.c.b16 %v439, %v439
        %v456 = vpack.c.b16 %v440, %v440
        %v457 = vpack.c.b16 %v441, %v441
        %v458 = vpack.c.b16 %v442, %v442
        %v459 = vpack.c.b16 %v443, %v443
        %v460 = vpack.c.b16 %v444, %v444
        %v461 = vpack.c.b16 %v445, %v445
        %478 = vst [vmem:[%s214] sm:$0xf] %v446
        %479 = vst [vmem:[%s214 + $0x4] sm:$0xf] %v447
        %480 = vst [vmem:[%s214 + $0x8] sm:$0xf] %v448
        %481 = vst [vmem:[%s214 + $0xc] sm:$0xf] %v449
        %482 = vst [vmem:[%s214 + $0x10] sm:$0xf] %v450
        %483 = vst [vmem:[%s214 + $0x14] sm:$0xf] %v451
        %484 = vst [vmem:[%s214 + $0x18] sm:$0xf] %v452
        %485 = vst [vmem:[%s214 + $0x1c] sm:$0xf] %v453
        %486 = vst [vmem:[%s214 + $0x20] sm:$0xf] %v454
        %487 = vst [vmem:[%s214 + $0x24] sm:$0xf] %v455
        %488 = vst [vmem:[%s214 + $0x28] sm:$0xf] %v456
        %489 = vst [vmem:[%s214 + $0x2c] sm:$0xf] %v457
        %490 = vst [vmem:[%s214 + $0x30] sm:$0xf] %v458
        %491 = vst [vmem:[%s214 + $0x34] sm:$0xf] %v459
        %492 = vst [vmem:[%s214 + $0x38] sm:$0xf] %v460
        %493 = vst [vmem:[%s214 + $0x3c] sm:$0xf] %v461
        %v494 = vadd.f32 %v352, %v355
        %v495 = vadd.f32 %v494, %v360
        %v496 = vadd.f32 %v495, %v363
        %v497 = vadd.f32 %v496, %v368
        %v498 = vadd.f32 %v497, %v371
        %v499 = vadd.f32 %v498, %v376
        %v500 = vadd.f32 %v499, %v379
        %v501 = vadd.f32 %v500, %v384
        %v502 = vadd.f32 %v501, %v387
        %v503 = vadd.f32 %v502, %v392
        %v504 = vadd.f32 %v503, %v395
        %v505 = vadd.f32 %v504, %v400
        %v506 = vadd.f32 %v505, %v403
        %v507 = vadd.f32 %v506, %v408
        %v508 = vadd.f32 %v507, %v411
        %v509 = vrot.slane %v508, 4
        %v510 = vadd.f32 %v508, %v509
        %v511 = vrot.slane %v510, 2
        %v512 = vadd.f32 %v510, %v511
        %v513 = vrot.slane %v512, 1
        %v514 = vadd.f32 %v512, %v513
        %v515 = vmul.f32 %v352, %v352
        %v516 = vmul.f32 %v355, %v355
        %v517 = vmul.f32 %v360, %v360
        %v518 = vmul.f32 %v363, %v363
        %v519 = vmul.f32 %v368, %v368
        %v520 = vmul.f32 %v371, %v371
        %v521 = vmul.f32 %v376, %v376
        %v522 = vmul.f32 %v379, %v379
        %v523 = vmul.f32 %v384, %v384
        %v524 = vmul.f32 %v387, %v387
        %v525 = vmul.f32 %v392, %v392
        %v526 = vmul.f32 %v395, %v395
        %v527 = vmul.f32 %v400, %v400
        %v528 = vmul.f32 %v403, %v403
        %v529 = vmul.f32 %v408, %v408
        %v530 = vmul.f32 %v411, %v411
        %v531 = vadd.f32 %v515, %v516
        %v532 = vadd.f32 %v531, %v517
        %v533 = vadd.f32 %v532, %v518
        %v534 = vadd.f32 %v533, %v519
        %v535 = vadd.f32 %v534, %v520
        %v536 = vadd.f32 %v535, %v521
        %v537 = vadd.f32 %v536, %v522
        %v538 = vadd.f32 %v537, %v523
        %v539 = vadd.f32 %v538, %v524
        %v540 = vadd.f32 %v539, %v525
        %v541 = vadd.f32 %v540, %v526
        %v542 = vadd.f32 %v541, %v527
        %v543 = vadd.f32 %v542, %v528
        %v544 = vadd.f32 %v543, %v529
        %v545 = vadd.f32 %v544, %v530
        %v546 = vrot.slane %v545, 4
        %v547 = vadd.f32 %v545, %v546
        %v548 = vrot.slane %v547, 2
        %v549 = vadd.f32 %v547, %v548
        %v550 = vrot.slane %v549, 1
        %v551 = vadd.f32 %v549, %v550
        %v552 = vlaneseq
        %v553 = vshrl.u32 %v552, 7
        %vm554 = vcmp.eq.s32.totalorder %v553, 0
        %v555 = vsel %vm554, %v514, %v551
        %556 = vst [vmem:[%s219] sm:$0xff] %v555
        %s557 = smul.u32 16, %s19
        %p558 = scmp.lt.s32.totalorder %s557, 31
        %s559 = scalar_select %p558, %s557, 31
        %s560 = smul.addr %s559, 4
        %s561 = scalar_lea.vmem %s2, %s560
        %p562 = scmp.lt.s32.totalorder %s19, 1
        %s563 = scalar_select %p562, %s19, 1
        %s564 = smul.addr %s563, 8
        %s565 = scalar_lea.vmem %s3, %s564
        // Predicated region
        $region37: #{prediction_mlp.2} parent=27 // pred_check
          %p566 = pneg %p84
        $region38: #{prediction_mlp.2} parent=27 // pred_check_branch
          %568 = sbr.rel (%p566) target = $region40
        $region39: #{prediction_mlp.2} parent=27 // pred_region
          %s569 = smul.u32 16, %s19
        $region40: #{prediction_mlp.2} parent=27 // pred_fallthru
          _
        // Predicated region
        $region41: #{prediction_mlp.2} parent=27 // pred_check
          %p570 = pneg %p110
        $region42: #{prediction_mlp.2} parent=27 // pred_check_branch
          %572 = sbr.rel (%p570) target = $region44
        $region43: #{prediction_mlp.2} parent=27 // pred_region
          _
        $region44: #{prediction_mlp.2} parent=27 // pred_fallthru
          _
      $region28: #{prediction_mlp.2} parent=5 // pred_fallthru
        _
      %p573 = scmp.le.s32.totalorder 2, %s14
      // Predicated region
      $region45: #{prediction_mlp.2} parent=5 // pred_check
        %p574 = pneg %p573
      $region46: #{prediction_mlp.2} parent=5 // pred_check_branch
        %576 = sbr.rel (%p574) target = $region48
      $region47: #{prediction_mlp.2} parent=5 // pred_region
        %s577 = ssub.s32 %s14, 2
        // Predicated region
        $region49: #{prediction_mlp.2} parent=47 // pred_check
          %p578 = pneg %p90
        $region50: #{prediction_mlp.2} parent=47 // pred_check_branch
          %580 = sbr.rel (%p578) target = $region52
        $region51: #{prediction_mlp.2} parent=47 // pred_region
          %s581 = smul.u32 16, %s20
          %p582 = scmp.lt.s32.totalorder %s581, 31
          %s583 = scalar_select %p582, %s581, 31
          %s584 = smul.addr %s583, 4
          %s585 = scalar_lea.vmem %s2, %s584
        $region52: #{prediction_mlp.2} parent=47 // pred_fallthru
          _
        // Predicated region
        $region53: #{prediction_mlp.2} parent=47 // pred_check
          %p586 = pneg %p116
        $region54: #{prediction_mlp.2} parent=47 // pred_check_branch
          %588 = sbr.rel (%p586) target = $region56
        $region55: #{prediction_mlp.2} parent=47 // pred_region
          %p589 = scmp.lt.s32.totalorder %s20, 1
          %s590 = scalar_select %p589, %s20, 1
          %s591 = smul.addr %s590, 8
          %s592 = scalar_lea.vmem %s3, %s591
        $region56: #{prediction_mlp.2} parent=47 // pred_fallthru
          _
      $region48: #{prediction_mlp.2} parent=5 // pred_fallthru
        _
    $region6: #{prediction_mlp.2} parent=1 // loop_footer
      %s18 = sadd.s32 1, %s14
    $region7: #{prediction_mlp.2} parent=1 // loop_footer_branch
      %13 = sbr.rel target = $region3
    $region8: #{prediction_mlp.2} parent=1 // loop_exit
      _
    %593 = vsyncpa [#allocation3], 1
    %s594 = scalar_lea.sflag [#allocation3], 1
    %595 = vsyncpa %s594, 1
    %596 = vsyncpa [#allocation5], 1

// kernel: prediction_mlp.3
$region0: #{prediction_mlp.3}
  #allocation0 [shape = 'u32[]', space=smem, size = 0x4, offset = 0x4, fixed_abs, tag = 'smem constant byte address 0x4 - core index']
  #allocation1 [shape = 'u32[144,128]{1,0:T(1,128)}', space=vmem, size = 0x12000, scoped, tag = 'internal scratch']
  %s0 = inlined_call_operand.vmem [shape: bf16[256,128], index: 0, kind: input, shape index: {}]
  %s1 = inlined_call_operand.vmem [shape: f32[1,128], index: 1, kind: input, shape index: {}]
  %s2 = inlined_call_operand.vmem [shape: f32[1,128], index: 2, kind: input, shape index: {}]
  %s3 = inlined_call_operand.vmem [shape: f32[128,256], index: 3, kind: input, shape index: {}]
  %s4 = inlined_call_operand.vmem [shape: f32[1,256], index: 4, kind: input, shape index: {}]
  %s5 = inlined_call_operand.hbm [shape: f32[256,256], index: 5, kind: output, shape index: {}]
  %s6 = sld [smem:[#allocation0]]
  $region53: #{prediction_mlp.3} parent=0
    _
  %s8 = ssub.s32 1, %s6
  %s9 = scalar_select 0, %s8, %s6
  $region1: #{prediction_mlp.3} parent=0
    #allocation2 [shape = 'u8[262144]{0}', space=vmem, size = 0x40000, scoped, tag = 'output window, operand 0']
    #allocation3 [shape = 's32[2]{0}', space=sflag, size = 0x8, scoped, tag = 'scoped memory for prediction_mlp.3']
    %10 = vsyncpa [#allocation3], 0
    %s11 = scalar_lea.sflag [#allocation3], 1
    %12 = vsyncpa %s11, 0
    loop: start=0, step=1, limit=4
    $region2: #{prediction_mlp.3} parent=1 // loop_pre_header
      _
    $region3: #{prediction_mlp.3} parent=1 // loop_header
      %s14 = sphi 0, %s18
      %p15 = scmp.ge.s32.totalorder %s14, 4
      %s24 = sphi 0, %s26
      %s27 = sphi 0, %s24
      %s28 = sphi 0, %s27
      %s44 = sphi 0, %s28
      %s48 = sphi 0, %s48
      %s50 = sphi 0, %s48
      %s51 = sphi 0, %s50
      %s65 = sphi 0, %s51
      %s69 = sphi 0, %s69
      %s71 = sphi 0, %s69
      %s72 = sphi 0, %s71
      %s86 = sphi 0, %s72
      %s90 = sphi 0, %s90
      %s92 = sphi 0, %s90
      %s93 = sphi 0, %s92
      %s107 = sphi 0, %s93
      %s111 = sphi 0, %s111
      %s113 = sphi 0, %s111
      %s114 = sphi 0, %s113
      %s128 = sphi 0, %s114
      %s134 = sphi 0, %s136
      %s137 = sphi 0, %s134
      %s138 = sphi 0, %s137
      %s154 = sphi 0, %s138
    $region4: #{prediction_mlp.3} parent=1 // loop_header_branch
      %17 = sbr.rel (%p15) target = $region8
    $region5: #{prediction_mlp.3} parent=1 // loop_body
      %s19 = ssub.s32 %s14, 1
      %s20 = ssub.s32 %s14, 2
      %s21 = sadd.s32 %s14, 1
      %s22 = ssub.s32 %s14, %s21
      %p23 = scmp.eq.s32.totalorder %s22, 0
      %s25 = sadd.s32 %s24, 1
      %s26 = scalar_select %p23, %s24, %s25
      %p29 = pneg %p23
      %p30 = scmp.eq.s32.totalorder %s14, 1
      %p31 = por %p29, %p30
      %p32 = scmp.ne.s32.totalorder %s24, %s27
      %p33 = scmp.eq.s32.totalorder %s14, 0
      %p34 = por %p32, %p33
      %p35 = scmp.ne.s32.totalorder %s24, %s27
      %p36 = scmp.eq.s32.totalorder %s19, 1
      %p37 = por %p35, %p36
      %p38 = scmp.ne.s32.totalorder %s27, %s28
      %p39 = scmp.eq.s32.totalorder %s19, 0
      %p40 = por %p38, %p39
      %p41 = scmp.ne.s32.totalorder %s27, %s28
      %p42 = scmp.eq.s32.totalorder %s20, 1
      %p43 = por %p41, %p42
      %p45 = scmp.ne.s32.totalorder %s28, %s44
      %p46 = scmp.eq.s32.totalorder %s20, 0
      %p47 = por %p45, %p46
      %s49 = sadd.s32 %s48, 1
      %p52 = scmp.eq.s32.totalorder %s14, 1
      %p53 = scmp.ne.s32.totalorder %s48, %s50
      %p54 = scmp.eq.s32.totalorder %s14, 0
      %p55 = por %p53, %p54
      %p56 = scmp.ne.s32.totalorder %s48, %s50
      %p57 = scmp.eq.s32.totalorder %s19, 1
      %p58 = por %p56, %p57
      %p59 = scmp.ne.s32.totalorder %s50, %s51
      %p60 = scmp.eq.s32.totalorder %s19, 0
      %p61 = por %p59, %p60
      %p62 = scmp.ne.s32.totalorder %s50, %s51
      %p63 = scmp.eq.s32.totalorder %s20, 1
      %p64 = por %p62, %p63
      %p66 = scmp.ne.s32.totalorder %s51, %s65
      %p67 = scmp.eq.s32.totalorder %s20, 0
      %p68 = por %p66, %p67
      %s70 = sadd.s32 %s69, 1
      %p73 = scmp.eq.s32.totalorder %s14, 1
      %p74 = scmp.ne.s32.totalorder %s69, %s71
      %p75 = scmp.eq.s32.totalorder %s14, 0
      %p76 = por %p74, %p75
      %p77 = scmp.ne.s32.totalorder %s69, %s71
      %p78 = scmp.eq.s32.totalorder %s19, 1
      %p79 = por %p77, %p78
      %p80 = scmp.ne.s32.totalorder %s71, %s72
      %p81 = scmp.eq.s32.totalorder %s19, 0
      %p82 = por %p80, %p81
      %p83 = scmp.ne.s32.totalorder %s71, %s72
      %p84 = scmp.eq.s32.totalorder %s20, 1
      %p85 = por %p83, %p84
      %p87 = scmp.ne.s32.totalorder %s72, %s86
      %p88 = scmp.eq.s32.totalorder %s20, 0
      %p89 = por %p87, %p88
      %s91 = sadd.s32 %s90, 1
      %p94 = scmp.eq.s32.totalorder %s14, 1
      %p95 = scmp.ne.s32.totalorder %s90, %s92
      %p96 = scmp.eq.s32.totalorder %s14, 0
      %p97 = por %p95, %p96
      %p98 = scmp.ne.s32.totalorder %s90, %s92
      %p99 = scmp.eq.s32.totalorder %s19, 1
      %p100 = por %p98, %p99
      %p101 = scmp.ne.s32.totalorder %s92, %s93
      %p102 = scmp.eq.s32.totalorder %s19, 0
      %p103 = por %p101, %p102
      %p104 = scmp.ne.s32.totalorder %s92, %s93
      %p105 = scmp.eq.s32.totalorder %s20, 1
      %p106 = por %p104, %p105
      %p108 = scmp.ne.s32.totalorder %s93, %s107
      %p109 = scmp.eq.s32.totalorder %s20, 0
      %p110 = por %p108, %p109
      %s112 = sadd.s32 %s111, 1
      %p115 = scmp.eq.s32.totalorder %s14, 1
      %p116 = scmp.ne.s32.totalorder %s111, %s113
      %p117 = scmp.eq.s32.totalorder %s14, 0
      %p118 = por %p116, %p117
      %p119 = scmp.ne.s32.totalorder %s111, %s113
      %p120 = scmp.eq.s32.totalorder %s19, 1
      %p121 = por %p119, %p120
      %p122 = scmp.ne.s32.totalorder %s113, %s114
      %p123 = scmp.eq.s32.totalorder %s19, 0
      %p124 = por %p122, %p123
      %p125 = scmp.ne.s32.totalorder %s113, %s114
      %p126 = scmp.eq.s32.totalorder %s20, 1
      %p127 = por %p125, %p126
      %p129 = scmp.ne.s32.totalorder %s114, %s128
      %p130 = scmp.eq.s32.totalorder %s20, 0
      %p131 = por %p129, %p130
      %s132 = ssub.s32 %s14, %s21
      %p133 = scmp.eq.s32.totalorder %s132, 0
      %s135 = sadd.s32 %s134, 1
      %s136 = scalar_select %p133, %s134, %s135
      %p139 = pneg %p133
      %p140 = scmp.eq.s32.totalorder %s14, 1
      %p141 = por %p139, %p140
      %p142 = scmp.ne.s32.totalorder %s134, %s137
      %p143 = scmp.eq.s32.totalorder %s14, 0
      %p144 = por %p142, %p143
      %p145 = scmp.ne.s32.totalorder %s134, %s137
      %p146 = scmp.eq.s32.totalorder %s19, 1
      %p147 = por %p145, %p146
      %p148 = scmp.ne.s32.totalorder %s137, %s138
      %p149 = scmp.eq.s32.totalorder %s19, 0
      %p150 = por %p148, %p149
      %p151 = scmp.ne.s32.totalorder %s137, %s138
      %p152 = scmp.eq.s32.totalorder %s20, 1
      %p153 = por %p151, %p152
      %p155 = scmp.ne.s32.totalorder %s138, %s154
      %p156 = scmp.eq.s32.totalorder %s20, 0
      %p157 = por %p155, %p156
      %p158 = scmp.le.s32.totalorder 1, %s14
      %p159 = scmp.lt.s32.totalorder %s14, 3
      %p160 = pnand %p158, %p159
      %p161 = pneg %p160
      // Predicated region
      $region9: #{prediction_mlp.3} parent=5 // pred_check
        _
      $region10: #{prediction_mlp.3} parent=5 // pred_check_branch
        %163 = sbr.rel (%p160) target = $region12
      $region11: #{prediction_mlp.3} parent=5 // pred_region
        %s164 = ssub.s32 %s14, 1
        // Predicated region
        $region13: #{prediction_mlp.3} parent=11 // pred_check
          %p165 = pneg %p61
        $region14: #{prediction_mlp.3} parent=11 // pred_check_branch
          %167 = sbr.rel (%p165) target = $region16
        $region15: #{prediction_mlp.3} parent=11 // pred_region
          _
        $region16: #{prediction_mlp.3} parent=11 // pred_fallthru
          _
        // Predicated region
        $region17: #{prediction_mlp.3} parent=11 // pred_check
          %p168 = pneg %p82
        $region18: #{prediction_mlp.3} parent=11 // pred_check_branch
          %170 = sbr.rel (%p168) target = $region20
        $region19: #{prediction_mlp.3} parent=11 // pred_region
          _
        $region20: #{prediction_mlp.3} parent=11 // pred_fallthru
          _
        // Predicated region
        $region21: #{prediction_mlp.3} parent=11 // pred_check
          %p171 = pneg %p103
        $region22: #{prediction_mlp.3} parent=11 // pred_check_branch
          %173 = sbr.rel (%p171) target = $region24
        $region23: #{prediction_mlp.3} parent=11 // pred_region
          _
        $region24: #{prediction_mlp.3} parent=11 // pred_fallthru
          _
        // Predicated region
        $region25: #{prediction_mlp.3} parent=11 // pred_check
          %p174 = pneg %p124
        $region26: #{prediction_mlp.3} parent=11 // pred_check_branch
          %176 = sbr.rel (%p174) target = $region28
        $region27: #{prediction_mlp.3} parent=11 // pred_region
          _
        $region28: #{prediction_mlp.3} parent=11 // pred_fallthru
          _
      $region12: #{prediction_mlp.3} parent=5 // pred_fallthru
        _
      %p177 = scmp.lt.s32.totalorder %s14, 2
      // Predicated region
      $region29: #{prediction_mlp.3} parent=5 // pred_check
        %p178 = pneg %p177
      $region30: #{prediction_mlp.3} parent=5 // pred_check_branch
        %180 = sbr.rel (%p178) target = $region32
      $region31: #{prediction_mlp.3} parent=5 // pred_region
        // Predicated region
        $region33: #{prediction_mlp.3} parent=31 // pred_check
          %p181 = pneg %p34
        $region34: #{prediction_mlp.3} parent=31 // pred_check_branch
          %183 = sbr.rel (%p181) target = $region36
        $region35: #{prediction_mlp.3} parent=31 // pred_region
          %s184 = smul.u32 16, %s14
          %p185 = scmp.lt.s32.totalorder %s184, 31
          %s186 = scalar_select %p185, %s184, 31
          %s187 = smul.addr %s186, 4
          %s188 = scalar_lea.vmem %s0, %s187
          %s189 = smul.u32 16, %s14
        $region36: #{prediction_mlp.3} parent=31 // pred_fallthru
          _
      $region32: #{prediction_mlp.3} parent=5 // pred_fallthru
        _
      %p190 = scmp.le.s32.totalorder 1, %s14
      %p191 = scmp.lt.s32.totalorder %s14, 3
      %p192 = pnand %p190, %p191
      %p193 = pneg %p192
      // Predicated region
      $region37: #{prediction_mlp.3} parent=5 // pred_check
        _
      $region38: #{prediction_mlp.3} parent=5 // pred_check_branch
        %195 = sbr.rel (%p192) target = $region40
      $region39: #{prediction_mlp.3} parent=5 // pred_region
        %s196 = ssub.s32 %s14, 1
        %s197 = smul.u32 16, %s19
        %p198 = scmp.lt.s32.totalorder %s197, 31
        %s199 = scalar_select %p198, %s197, 31
        %s200 = smul.addr %s199, 4
        %s201 = scalar_lea.vmem %s0, %s200
        %p202 = pneg %p40
        %p203 = pneg %p37
        %p204 = pneg %p61
        %p205 = pneg %p58
        %p206 = pneg %p82
        %p207 = pneg %p79
        %p208 = pneg %p103
        %p209 = pneg %p100
        %p210 = pneg %p124
        %p211 = pneg %p121
        %p212 = pneg %p150
        %p213 = pneg %p147
        %s214 = sand.u32 %s137, 1
        %s215 = scalar_lea.sflag [#allocation3], %s214
        %s216 = sand.u32 %s137, 1
        %s217 = smul.addr %s216, 256
        %s218 = scalar_lea.vmem [#allocation2], %s217
        %s219 = smul.u32 16, %s19
        %p220 = scmp.lt.s32.totalorder %s219, 31
        %s221 = scalar_select %p220, %s219, 31
        %s222 = smul.addr %s221, 4
        %s223 = scalar_lea.vmem %s0, %s222
        %s224 = smul.u32 16, %s19
        %s225 = smul.u32 16, %s19
        %v227 = vld [vmem:[%s223] sm:$0xf]
        %v228 = vld [vmem:[%s223 + $0x4] sm:$0xf]
        %v229 = vld [vmem:[%s223 + $0x8] sm:$0xf]
        %v230 = vld [vmem:[%s223 + $0xc] sm:$0xf]
        %v231 = vld [vmem:[%s223 + $0x10] sm:$0xf]
        %v232 = vld [vmem:[%s223 + $0x14] sm:$0xf]
        %v233 = vld [vmem:[%s223 + $0x18] sm:$0xf]
        %v234 = vld [vmem:[%s223 + $0x1c] sm:$0xf]
        %v235 = vld [vmem:[%s223 + $0x20] sm:$0xf]
        %v236 = vld [vmem:[%s223 + $0x24] sm:$0xf]
        %v237 = vld [vmem:[%s223 + $0x28] sm:$0xf]
        %v238 = vld [vmem:[%s223 + $0x2c] sm:$0xf]
        %v239 = vld [vmem:[%s223 + $0x30] sm:$0xf]
        %v240 = vld [vmem:[%s223 + $0x34] sm:$0xf]
        %v241 = vld [vmem:[%s223 + $0x38] sm:$0xf]
        %v242 = vld [vmem:[%s223 + $0x3c] sm:$0xf]
        %v243 = vunpack.c.l.bf16 %v227
        %v244 = vunpack.c.l.bf16 %v228
        %v245 = vunpack.c.l.bf16 %v229
        %v246 = vunpack.c.l.bf16 %v230
        %v247 = vunpack.c.l.bf16 %v231
        %v248 = vunpack.c.l.bf16 %v232
        %v249 = vunpack.c.l.bf16 %v233
        %v250 = vunpack.c.l.bf16 %v234
        %v251 = vunpack.c.l.bf16 %v235
        %v252 = vunpack.c.l.bf16 %v236
        %v253 = vunpack.c.l.bf16 %v237
        %v254 = vunpack.c.l.bf16 %v238
        %v255 = vunpack.c.l.bf16 %v239
        %v256 = vunpack.c.l.bf16 %v240
        %v257 = vunpack.c.l.bf16 %v241
        %v258 = vunpack.c.l.bf16 %v242
        %v259 = vld [vmem:[%s1] sm:$0x1]
        %v261 = vlaneseq
        %v262 = vshrl.u32 %v261, 7
        %v263 = vsub.s32 0, %v262
        %v264 = vrot.slane %v259, %v263
        %v266 = vmul.f32 %v243, %v264
        %v267 = vmul.f32 %v244, %v264
        %v268 = vmul.f32 %v245, %v264
        %v269 = vmul.f32 %v246, %v264
        %v270 = vmul.f32 %v247, %v264
        %v271 = vmul.f32 %v248, %v264
        %v272 = vmul.f32 %v249, %v264
        %v273 = vmul.f32 %v250, %v264
        %v274 = vmul.f32 %v251, %v264
        %v275 = vmul.f32 %v252, %v264
        %v276 = vmul.f32 %v253, %v264
        %v277 = vmul.f32 %v254, %v264
        %v278 = vmul.f32 %v255, %v264
        %v279 = vmul.f32 %v256, %v264
        %v280 = vmul.f32 %v257, %v264
        %v281 = vmul.f32 %v258, %v264
        %v282 = vld [vmem:[%s2] sm:$0x1]
        %v284 = vlaneseq
        %v285 = vshrl.u32 %v284, 7
        %v286 = vsub.s32 0, %v285
        %v287 = vrot.slane %v282, %v286
        %v289 = vadd.f32 %v266, %v287
        %v290 = vadd.f32 %v267, %v287
        %v291 = vadd.f32 %v268, %v287
        %v292 = vadd.f32 %v269, %v287
        %v293 = vadd.f32 %v270, %v287
        %v294 = vadd.f32 %v271, %v287
        %v295 = vadd.f32 %v272, %v287
        %v296 = vadd.f32 %v273, %v287
        %v297 = vadd.f32 %v274, %v287
        %v298 = vadd.f32 %v275, %v287
        %v299 = vadd.f32 %v276, %v287
        %v300 = vadd.f32 %v277, %v287
        %v301 = vadd.f32 %v278, %v287
        %v302 = vadd.f32 %v279, %v287
        %v303 = vadd.f32 %v280, %v287
        %v304 = vadd.f32 %v281, %v287
        %v305 = vmax.f32 %v289, 0.0
        %v306 = vmax.f32 %v290, 0.0
        %v307 = vmax.f32 %v291, 0.0
        %v308 = vmax.f32 %v292, 0.0
        %v309 = vmax.f32 %v293, 0.0
        %v310 = vmax.f32 %v294, 0.0
        %v311 = vmax.f32 %v295, 0.0
        %v312 = vmax.f32 %v296, 0.0
        %v313 = vmax.f32 %v297, 0.0
        %v314 = vmax.f32 %v298, 0.0
        %v315 = vmax.f32 %v299, 0.0
        %v316 = vmax.f32 %v300, 0.0
        %v317 = vmax.f32 %v301, 0.0
        %v318 = vmax.f32 %v302, 0.0
        %v319 = vmax.f32 %v303, 0.0
        %v320 = vmax.f32 %v304, 0.0
        %v321 = vpack.c.bf16 %v306, %v305
        %v322 = vpack.c.bf16 %v308, %v307
        %v323 = vpack.c.bf16 %v310, %v309
        %v324 = vpack.c.bf16 %v312, %v311
        %v325 = vpack.c.bf16 %v314, %v313
        %v326 = vpack.c.bf16 %v316, %v315
        %v327 = vpack.c.bf16 %v318, %v317
        %v328 = vpack.c.bf16 %v320, %v319
        %v329 = vld [vmem:[%s3] sm:$0xff]
        %v330 = vld [vmem:[%s3 + $0x8] sm:$0xff]
        %v331 = vld [vmem:[%s3 + $0x10] sm:$0xff]
        %v332 = vld [vmem:[%s3 + $0x18] sm:$0xff]
        %v333 = vld [vmem:[%s3 + $0x20] sm:$0xff]
        %v334 = vld [vmem:[%s3 + $0x28] sm:$0xff]
        %v335 = vld [vmem:[%s3 + $0x30] sm:$0xff]
        %v336 = vld [vmem:[%s3 + $0x38] sm:$0xff]
        %v337 = vld [vmem:[%s3 + $0x40] sm:$0xff]
        %v338 = vld [vmem:[%s3 + $0x48] sm:$0xff]
        %v339 = vld [vmem:[%s3 + $0x50] sm:$0xff]
        %v340 = vld [vmem:[%s3 + $0x58] sm:$0xff]
        %v341 = vld [vmem:[%s3 + $0x60] sm:$0xff]
        %v342 = vld [vmem:[%s3 + $0x68] sm:$0xff]
        %v343 = vld [vmem:[%s3 + $0x70] sm:$0xff]
        %v344 = vld [vmem:[%s3 + $0x78] sm:$0xff]
        %v345 = vld [vmem:[%s3 + $0x80] sm:$0xff]
        %v346 = vld [vmem:[%s3 + $0x88] sm:$0xff]
        %v347 = vld [vmem:[%s3 + $0x90] sm:$0xff]
        %v348 = vld [vmem:[%s3 + $0x98] sm:$0xff]
        %v349 = vld [vmem:[%s3 + $0xa0] sm:$0xff]
        %v350 = vld [vmem:[%s3 + $0xa8] sm:$0xff]
        %v351 = vld [vmem:[%s3 + $0xb0] sm:$0xff]
        %v352 = vld [vmem:[%s3 + $0xb8] sm:$0xff]
        %v353 = vld [vmem:[%s3 + $0xc0] sm:$0xff]
        %v354 = vld [vmem:[%s3 + $0xc8] sm:$0xff]
        %v355 = vld [vmem:[%s3 + $0xd0] sm:$0xff]
        %v356 = vld [vmem:[%s3 + $0xd8] sm:$0xff]
        %v357 = vld [vmem:[%s3 + $0xe0] sm:$0xff]
        %v358 = vld [vmem:[%s3 + $0xe8] sm:$0xff]
        %v359 = vld [vmem:[%s3 + $0xf0] sm:$0xff]
        %v360 = vld [vmem:[%s3 + $0xf8] sm:$0xff]
        %v361 = vpack.c.bf16 %v331, %v329
        %v362 = vpack.c.bf16 %v332, %v330
        %v363 = vpack.c.bf16 %v335, %v333
        %v364 = vpack.c.bf16 %v336, %v334
        %v365 = vpack.c.bf16 %v339, %v337
        %v366 = vpack.c.bf16 %v340, %v338
        %v367 = vpack.c.bf16 %v343, %v341
        %v368 = vpack.c.bf16 %v344, %v342
        %v369 = vpack.c.bf16 %v347, %v345
        %v370 = vpack.c.bf16 %v348, %v346
        %v371 = vpack.c.bf16 %v351, %v349
        %v372 = vpack.c.bf16 %v352, %v350
        %v373 = vpack.c.bf16 %v355, %v353
        %v374 = vpack.c.bf16 %v356, %v354
        %v375 = vpack.c.bf16 %v359, %v357
        %v376 = vpack.c.bf16 %v360, %v358
        %v377 = vld [vmem:[%s4] sm:$0x3]
        %v379 = vlaneseq
        %v380 = vshrl.u32 %v379, 7
        %v381 = vsub.s32 0, %v380
        %v382 = vrot.slane %v377, %v381
        %v383 = vlaneseq
        %v384 = vshrl.u32 %v383, 7
        %v385 = vsub.s32 1, %v384
        %v386 = vrot.slane %v377, %v385
        %389 = vmatprep.subr.bf16.mxu0 %v376
        %390 = vmatpush1.bf16.msra.mxu0 %v375
        %391 = vmatprep.subr.bf16.mxu0 %v374
        %392 = vmatpush1.bf16.msra.mxu0 %v373
        %393 = vmatprep.subr.bf16.mxu0 %v372
        %394 = vmatpush1.bf16.msra.mxu0 %v371
        %395 = vmatprep.subr.bf16.mxu0 %v370
        %396 = vmatpush1.bf16.msra.mxu0 %v369
        %397 = vmatprep.subr.bf16.mxu0 %v368
        %398 = vmatpush1.bf16.msra.mxu0 %v367
        %399 = vmatprep.subr.bf16.mxu0 %v366
        %400 = vmatpush1.bf16.msra.mxu0 %v365
        %401 = vmatprep.subr.bf16.mxu0 %v364
        %402 = vmatpush1.bf16.msra.mxu0 %v363
        %403 = vmatprep.subr.bf16.mxu0 %v362
        %404 = vmatpush1.bf16.msra.mxu0 %v361
        %405 = vmatprep.subr.bf16.mxu0 0
        %406 = vmatpush2.bf16.msra.mxu0 0
        %407 = vmatprep.subr.bf16.mxu0 0
        %408 = vmatpush2.bf16.msra.mxu0 0
        %409 = vmatprep.subr.bf16.mxu0 0
        %410 = vmatpush2.bf16.msra.mxu0 0
        %411 = vmatprep.subr.bf16.mxu0 0
        %412 = vmatpush2.bf16.msra.mxu0 0
        %413 = vmatprep.subr.bf16.mxu0 0
        %414 = vmatpush2.bf16.msra.mxu0 0
        %415 = vmatprep.subr.bf16.mxu0 0
        %416 = vmatpush2.bf16.msra.mxu0 0
        %417 = vmatprep.subr.bf16.mxu0 0
        %418 = vmatpush2.bf16.msra.mxu0 0
        %419 = vmatprep.subr.bf16.mxu0 0
        %420 = vmatpush2.bf16.msra.mxu0 0
        %421 = vmatprep.mubr.bf16.mxu0 0
        %422 = vmatmul.mubr.bf16.gmra.mxu0 %v321
        %v423 = vpop.f32.mrf.mxu0
        %v424 = vadd.f32 %v382, %v423
        %v425 = vpop.f32.mrf.mxu0
        %v426 = vadd.f32 %v386, %v425
        %v427 = vpop.f32.mrf.mxu0
        %v428 = vadd.f32 %v382, %v427
        %v429 = vpop.f32.mrf.mxu0
        %v430 = vadd.f32 %v386, %v429
        %431 = vmatprep.mubr.bf16.mxu0 0
        %432 = vmatmul.mubr.bf16.gmra.mxu0 %v322
        %v433 = vpop.f32.mrf.mxu0
        %v434 = vadd.f32 %v382, %v433
        %v435 = vpop.f32.mrf.mxu0
        %v436 = vadd.f32 %v386, %v435
        %v437 = vpop.f32.mrf.mxu0
        %v438 = vadd.f32 %v382, %v437
        %v439 = vpop.f32.mrf.mxu0
        %v440 = vadd.f32 %v386, %v439
        %441 = vmatprep.mubr.bf16.mxu0 0
        %442 = vmatmul.mubr.bf16.gmra.mxu0 %v323
        %v443 = vpop.f32.mrf.mxu0
        %v444 = vadd.f32 %v382, %v443
        %v445 = vpop.f32.mrf.mxu0
        %v446 = vadd.f32 %v386, %v445
        %v447 = vpop.f32.mrf.mxu0
        %v448 = vadd.f32 %v382, %v447
        %v449 = vpop.f32.mrf.mxu0
        %v450 = vadd.f32 %v386, %v449
        %451 = vmatprep.mubr.bf16.mxu0 0
        %452 = vmatmul.mubr.bf16.gmra.mxu0 %v324
        %v453 = vpop.f32.mrf.mxu0
        %v454 = vadd.f32 %v382, %v453
        %v455 = vpop.f32.mrf.mxu0
        %v456 = vadd.f32 %v386, %v455
        %v457 = vpop.f32.mrf.mxu0
        %v458 = vadd.f32 %v382, %v457
        %v459 = vpop.f32.mrf.mxu0
        %v460 = vadd.f32 %v386, %v459
        %461 = vmatprep.mubr.bf16.mxu0 0
        %462 = vmatmul.mubr.bf16.gmra.mxu0 %v325
        %v463 = vpop.f32.mrf.mxu0
        %v464 = vadd.f32 %v382, %v463
        %v465 = vpop.f32.mrf.mxu0
        %v466 = vadd.f32 %v386, %v465
        %v467 = vpop.f32.mrf.mxu0
        %v468 = vadd.f32 %v382, %v467
        %v469 = vpop.f32.mrf.mxu0
        %v470 = vadd.f32 %v386, %v469
        %471 = vmatprep.mubr.bf16.mxu0 0
        %472 = vmatmul.mubr.bf16.gmra.mxu0 %v326
        %v473 = vpop.f32.mrf.mxu0
        %v474 = vadd.f32 %v382, %v473
        %v475 = vpop.f32.mrf.mxu0
        %v476 = vadd.f32 %v386, %v475
        %v477 = vpop.f32.mrf.mxu0
        %v478 = vadd.f32 %v382, %v477
        %v479 = vpop.f32.mrf.mxu0
        %v480 = vadd.f32 %v386, %v479
        %481 = vmatprep.mubr.bf16.mxu0 0
        %482 = vmatmul.mubr.bf16.gmra.mxu0 %v327
        %v483 = vpop.f32.mrf.mxu0
        %v484 = vadd.f32 %v382, %v483
        %v485 = vpop.f32.mrf.mxu0
        %v486 = vadd.f32 %v386, %v485
        %v487 = vpop.f32.mrf.mxu0
        %v488 = vadd.f32 %v382, %v487
        %v489 = vpop.f32.mrf.mxu0
        %v490 = vadd.f32 %v386, %v489
        %491 = vmatprep.mubr.bf16.mxu0 0
        %492 = vmatmul.mubr.bf16.gmra.mxu0 %v328
        %v493 = vpop.f32.mrf.mxu0
        %v494 = vadd.f32 %v382, %v493
        %v495 = vpop.f32.mrf.mxu0
        %v496 = vadd.f32 %v386, %v495
        %v497 = vpop.f32.mrf.mxu0
        %v498 = vadd.f32 %v382, %v497
        %v499 = vpop.f32.mrf.mxu0
        %v500 = vadd.f32 %v386, %v499
        %501 = vdwg.mxu0
        %502 = vst [vmem:[%s218] sm:$0xff] %v424
        %503 = vst [vmem:[%s218 + $0x8] sm:$0xff] %v426
        %504 = vst [vmem:[%s218 + $0x10] sm:$0xff] %v428
        %505 = vst [vmem:[%s218 + $0x18] sm:$0xff] %v430
        %506 = vst [vmem:[%s218 + $0x20] sm:$0xff] %v434
        %507 = vst [vmem:[%s218 + $0x28] sm:$0xff] %v436
        %508 = vst [vmem:[%s218 + $0x30] sm:$0xff] %v438
        %509 = vst [vmem:[%s218 + $0x38] sm:$0xff] %v440
        %510 = vst [vmem:[%s218 + $0x40] sm:$0xff] %v444
        %511 = vst [vmem:[%s218 + $0x48] sm:$0xff] %v446
        %512 = vst [vmem:[%s218 + $0x50] sm:$0xff] %v448
        %513 = vst [vmem:[%s218 + $0x58] sm:$0xff] %v450
        %514 = vst [vmem:[%s218 + $0x60] sm:$0xff] %v454
        %515 = vst [vmem:[%s218 + $0x68] sm:$0xff] %v456
        %516 = vst [vmem:[%s218 + $0x70] sm:$0xff] %v458
        %517 = vst [vmem:[%s218 + $0x78] sm:$0xff] %v460
        %518 = vst [vmem:[%s218 + $0x80] sm:$0xff] %v464
        %519 = vst [vmem:[%s218 + $0x88] sm:$0xff] %v466
        %520 = vst [vmem:[%s218 + $0x90] sm:$0xff] %v468
        %521 = vst [vmem:[%s218 + $0x98] sm:$0xff] %v470
        %522 = vst [vmem:[%s218 + $0xa0] sm:$0xff] %v474
        %523 = vst [vmem:[%s218 + $0xa8] sm:$0xff] %v476
        %524 = vst [vmem:[%s218 + $0xb0] sm:$0xff] %v478
        %525 = vst [vmem:[%s218 + $0xb8] sm:$0xff] %v480
        %526 = vst [vmem:[%s218 + $0xc0] sm:$0xff] %v484
        %527 = vst [vmem:[%s218 + $0xc8] sm:$0xff] %v486
        %528 = vst [vmem:[%s218 + $0xd0] sm:$0xff] %v488
        %529 = vst [vmem:[%s218 + $0xd8] sm:$0xff] %v490
        %530 = vst [vmem:[%s218 + $0xe0] sm:$0xff] %v494
        %531 = vst [vmem:[%s218 + $0xe8] sm:$0xff] %v496
        %532 = vst [vmem:[%s218 + $0xf0] sm:$0xff] %v498
        %533 = vst [vmem:[%s218 + $0xf8] sm:$0xff] %v500
        %s534 = sand.u32 %s137, 1
        %s535 = scalar_lea.sflag [#allocation3], %s534
        %s536 = sand.u32 %s137, 1
        %s537 = smul.addr %s536, 256
        %s538 = scalar_lea.vmem [#allocation2], %s537
        // Predicated region
        $region41: #{prediction_mlp.3} parent=39 // pred_check
          %p539 = pneg %p147
        $region42: #{prediction_mlp.3} parent=39 // pred_check_branch
          %541 = sbr.rel (%p539) target = $region44
        $region43: #{prediction_mlp.3} parent=39 // pred_region
          %s542 = smul.u32 16, %s19
          %s544 = ssub.s32 4096, 4096
          %545 = vsyncadd %s535, %s544
          %s546 = smul.addr %s542, 2
          %s547 = smul.addr %s546, 128
          %s548 = scalar_lea.hbm %s5, %s547
          %s549 = sshll.u32 %s538, 4
          %s550 = int_to_ptr.vmem [resolvable:$true] %s549
          %555 = dma.vmem_to_hbm [thread:$0]  %s550, 4096, %s548, %s535, 256, 256, 16
        $region44: #{prediction_mlp.3} parent=39 // pred_fallthru
          _
      $region40: #{prediction_mlp.3} parent=5 // pred_fallthru
        _
      %p556 = scmp.le.s32.totalorder 2, %s14
      // Predicated region
      $region45: #{prediction_mlp.3} parent=5 // pred_check
        %p557 = pneg %p556
      $region46: #{prediction_mlp.3} parent=5 // pred_check_branch
        %559 = sbr.rel (%p557) target = $region48
      $region47: #{prediction_mlp.3} parent=5 // pred_region
        %s560 = ssub.s32 %s14, 2
        // Predicated region
        $region49: #{prediction_mlp.3} parent=47 // pred_check
          %p561 = pneg %p153
        $region50: #{prediction_mlp.3} parent=47 // pred_check_branch
          %563 = sbr.rel (%p561) target = $region52
        $region51: #{prediction_mlp.3} parent=47 // pred_region
          %s564 = sand.u32 %s138, 1
          %s565 = scalar_lea.sflag [#allocation3], %s564
          %s566 = sand.u32 %s138, 1
          %s567 = smul.addr %s566, 256
          %s568 = scalar_lea.vmem [#allocation2], %s567
          %569 = dma.done %s565, 4096
        $region52: #{prediction_mlp.3} parent=47 // pred_fallthru
          _
      $region48: #{prediction_mlp.3} parent=5 // pred_fallthru
        _
    $region6: #{prediction_mlp.3} parent=1 // loop_footer
      %s18 = sadd.s32 1, %s14
    $region7: #{prediction_mlp.3} parent=1 // loop_footer_branch
      %13 = sbr.rel target = $region3
    $region8: #{prediction_mlp.3} parent=1 // loop_exit
      _
    %570 = vsyncpa [#allocation3], 1
    %s571 = scalar_lea.sflag [#allocation3], 1
    %572 = vsyncpa %s571, 1

</llo_original>
